<compile_context>
chip_gen: v7x
topology: tpu7x:2x2x1
jax: 0.10.0
libtpu: 0.0.40
codegen_flags: <defaults>
</compile_context>

<pallas_src>
import math

import jax
import jax.numpy as jnp
from jax.experimental import pallas as pl
from jax.experimental.pallas import tpu as pltpu

SLOPE = 0.01  # slope_Leaky_ReLU


def _leaky_relu(x, slope):
    return jnp.where(x > 0, x, slope * x)


def multilabel_nn_kernel(x_ref, w1_ref, b1_ref, w2_ref, b2_ref,
                         w3p_ref, b3p_ref, o_ref):
    # x tile: [TB, D] f32 -> bf16 for the MXU, f32 accumulation everywhere.
    x_bf = x_ref[...].astype(jnp.bfloat16)

    # fc1 + leaky_relu   (dropout1: identity in eval mode)
    h = jnp.dot(x_bf, w1_ref[...], preferred_element_type=jnp.float32) + b1_ref[...]
    h = _leaky_relu(h, SLOPE)                      # f32 epilogue

    # fc2 + leaky_relu   (dropout2: identity in eval mode)
    h2 = jnp.dot(h.astype(jnp.bfloat16), w2_ref[...],
                 preferred_element_type=jnp.float32) + b2_ref[...]
    h2 = _leaky_relu(h2, SLOPE)                    # f32 epilogue

    # fused fc3 + residual projection: [x, h2] @ [[Wp]; [W3]] + (bp + b3)
    xh = jnp.concatenate([x_bf, h2.astype(jnp.bfloat16)], axis=-1)  # [TB, D+128]
    z = jnp.dot(xh, w3p_ref[...], preferred_element_type=jnp.float32) + b3p_ref[...]

    # lane-dense (C_pad multiple of 128) sigmoid + store
    o_ref[...] = jax.nn.sigmoid(z).astype(o_ref.dtype)


def multilabel_nn_forward(x, params, num_classes, *, max_tb=256):
    """x: [B, input_size] float32. params: fused / padded weights (see init_params)."""
    B, D = x.shape
    H1 = params["w1"].shape[1]          # 512
    H2 = params["w2"].shape[1]          # 128
    K3, C_pad = params["w3p"].shape     # (D + 128, padded classes)

    # Batch tiling: full batch if small, else 256-row tiles (pad B if needed).
    TB = B if B <= max_tb else max_tb
    B_pad = TB * pl.cdiv(B, TB)
    if B_pad != B:
        x = jnp.pad(x, ((0, B_pad - B), (0, 0)))
    grid = (B_pad // TB,)

    out = pl.pallas_call(
        multilabel_nn_kernel,
        out_shape=jax.ShapeDtypeStruct((B_pad, C_pad), jnp.float32),
        grid=grid,
        in_specs=[
            pl.BlockSpec((TB, D), lambda i: (i, 0)),      # x     (tiled on batch)
            pl.BlockSpec((D, H1), lambda i: (0, 0)),      # w1    (resident)
            pl.BlockSpec((1, H1), lambda i: (0, 0)),      # b1    (resident)
            pl.BlockSpec((H1, H2), lambda i: (0, 0)),     # w2    (resident)
            pl.BlockSpec((1, H2), lambda i: (0, 0)),      # b2    (resident)
            pl.BlockSpec((K3, C_pad), lambda i: (0, 0)),  # w3p   (resident)
            pl.BlockSpec((1, C_pad), lambda i: (0, 0)),   # b3p   (resident)
        ],
        out_specs=pl.BlockSpec((TB, C_pad), lambda i: (i, 0)),
        compiler_params=pltpu.CompilerParams(
            dimension_semantics=("parallel",),            # v7x: shard batch over 2 TCs
        ),
    )(x, params["w1"], params["b1"], params["w2"], params["b2"],
      params["w3p"], params["b3p"])

    return out[:B, :num_classes]


def init_params(key, input_size, num_classes, slope=SLOPE):
    """Deterministic init mirroring the PyTorch module, then fused/padded for the kernel.

    Weights are generated in PyTorch layout [out, in] with the matching init
    distributions, transposed to [in, out], the projection is fused into fc3
    along the K axis, num_classes is zero-padded to a multiple of 128, and
    weight matrices are cast to bf16 (biases stay f32).
    """
    ks = jax.random.split(key, 8)

    def kaiming_normal_fan_out(k, out_f, in_f):
        gain = math.sqrt(2.0 / (1.0 + slope ** 2))
        std = gain / math.sqrt(out_f)  # fan_out for Linear weight [out, in]
        return std * jax.random.normal(k, (out_f, in_f), jnp.float32)

    def xavier_normal(k, out_f, in_f):
        std = math.sqrt(2.0 / (in_f + out_f))
        return std * jax.random.normal(k, (out_f, in_f), jnp.float32)

    def linear_bias(k, out_f, in_f):
        bound = 1.0 / math.sqrt(in_f)
        return jax.random.uniform(k, (1, out_f), jnp.float32, -bound, bound)

    w1 = kaiming_normal_fan_out(ks[0], 512, input_size)
    b1 = linear_bias(ks[1], 512, input_size)
    w2 = kaiming_normal_fan_out(ks[2], 128, 512)
    b2 = linear_bias(ks[3], 128, 512)
    w3 = xavier_normal(ks[4], num_classes, 128)
    b3 = linear_bias(ks[5], num_classes, 128)
    wp = kaiming_normal_fan_out(ks[6], num_classes, input_size)
    bp = linear_bias(ks[7], num_classes, input_size)

    # Fuse residual projection into fc3:  [x, h2] @ [[Wp]; [W3]] + (bp + b3)
    w3p = jnp.concatenate([wp.T, w3.T], axis=0)     # [input_size + 128, C]
    b3p = b3 + bp                                   # [1, C]

    # Zero-pad classes up to a lane-dense multiple of 128.
    C = num_classes
    C_pad = 128 * pl.cdiv(C, 128)
    w3p = jnp.pad(w3p, ((0, 0), (0, C_pad - C)))
    b3p = jnp.pad(b3p, ((0, 0), (0, C_pad - C)))

    return {
        "w1": w1.T.astype(jnp.bfloat16), "b1": b1,
        "w2": w2.T.astype(jnp.bfloat16), "b2": b2,
        "w3p": w3p.astype(jnp.bfloat16), "b3p": b3p,
    }


def reference_forward(x, params, num_classes):
    """Pure-JAX reference using the exact same fused/padded bf16 weights."""
    x_bf = x.astype(jnp.bfloat16)
    h = jnp.dot(x_bf, params["w1"], preferred_element_type=jnp.float32) + params["b1"]
    h = _leaky_relu(h, SLOPE)
    h2 = jnp.dot(h.astype(jnp.bfloat16), params["w2"],
                 preferred_element_type=jnp.float32) + params["b2"]
    h2 = _leaky_relu(h2, SLOPE)
    xh = jnp.concatenate([x_bf, h2.astype(jnp.bfloat16)], axis=-1)
    z = jnp.dot(xh, params["w3p"], preferred_element_type=jnp.float32) + params["b3p"]
    return jax.nn.sigmoid(z)[:, :num_classes]


if __name__ == "__main__":
    input_size = 32
    num_classes = 10
    batch = 4

    key = jax.random.PRNGKey(0)
    k_x, k_p = jax.random.split(key)

    x = jax.random.normal(k_x, (batch, input_size), jnp.float32)
    params = init_params(k_p, input_size, num_classes)

    out = multilabel_nn_forward(x, params, num_classes)
    out = jax.block_until_ready(out)

    ref = reference_forward(x, params, num_classes)
    assert out.shape == (batch, num_classes)
    assert jnp.allclose(out, ref, atol=1e-3, rtol=1e-3), "mismatch vs reference"

    print("KERNEL_OK")
</pallas_src>

<mosaic_0001>
module attributes {stable_mosaic.version = 11 : i64} {
  func.func @multilabel_nn_kernel(%arg0: i32, %arg1: memref<4x32xf32, #tpu.memory_space<vmem>>, %arg2: memref<32x512xbf16, #tpu.memory_space<vmem>>, %arg3: memref<1x512xf32, #tpu.memory_space<vmem>>, %arg4: memref<512x128xbf16, #tpu.memory_space<vmem>>, %arg5: memref<1x128xf32, #tpu.memory_space<vmem>>, %arg6: memref<160x128xbf16, #tpu.memory_space<vmem>>, %arg7: memref<1x128xf32, #tpu.memory_space<vmem>>, %arg8: memref<4x128xf32, #tpu.memory_space<vmem>>) attributes {dimension_semantics = [#tpu.dimension_semantics<parallel>], iteration_bounds = array<i64: 1>, scalar_prefetch = 0 : i64, scratch_operands = 0 : i64, tpu.core_type = #tpu.core_type<tc>, window_params = [{transform_indices = @transform_0, window_bounds = array<i64: 4, 32>}, {pipeline_mode = #tpu.pipeline_mode<synchronous>, transform_indices = @transform_1, window_bounds = array<i64: 32, 512>}, {pipeline_mode = #tpu.pipeline_mode<synchronous>, transform_indices = @transform_2, window_bounds = array<i64: 1, 512>}, {pipeline_mode = #tpu.pipeline_mode<synchronous>, transform_indices = @transform_3, window_bounds = array<i64: 512, 128>}, {pipeline_mode = #tpu.pipeline_mode<synchronous>, transform_indices = @transform_4, window_bounds = array<i64: 1, 128>}, {pipeline_mode = #tpu.pipeline_mode<synchronous>, transform_indices = @transform_5, window_bounds = array<i64: 160, 128>}, {pipeline_mode = #tpu.pipeline_mode<synchronous>, transform_indices = @transform_6, window_bounds = array<i64: 1, 128>}, {transform_indices = @transform_7, window_bounds = array<i64: 4, 128>}]} {
    %c0 = arith.constant 0 : index
    %c0_0 = arith.constant 0 : index
    %0 = vector.load %arg1[%c0, %c0_0] : memref<4x32xf32, #tpu.memory_space<vmem>>, vector<4x32xf32>
    %1 = arith.truncf %0 : vector<4x32xf32> to vector<4x32xbf16>
    %c0_1 = arith.constant 0 : index
    %c0_2 = arith.constant 0 : index
    %2 = vector.load %arg2[%c0_1, %c0_2] : memref<32x512xbf16, #tpu.memory_space<vmem>>, vector<32x512xbf16>
    %cst = arith.constant dense<0.000000e+00> : vector<4x512xf32>
    %3 = tpu.matmul %1, %2, %cst {dimension_numbers = #tpu.dot_dimension_numbers<[1], [0], [0], [1], [0, 0, 1, 1], [], []>} : vector<4x32xbf16>, vector<32x512xbf16>, vector<4x512xf32> -> vector<4x512xf32>
    %c0_3 = arith.constant 0 : index
    %c0_4 = arith.constant 0 : index
    %4 = vector.load %arg3[%c0_3, %c0_4] : memref<1x512xf32, #tpu.memory_space<vmem>>, vector<1x512xf32>
    %5 = vector.broadcast %4 : vector<1x512xf32> to vector<4x512xf32>
    %6 = arith.addf %3, %5 : vector<4x512xf32>
    %cst_5 = arith.constant 0.000000e+00 : f32
    %7 = vector.broadcast %cst_5 : f32 to vector<4x512xf32>
    %8 = arith.cmpf ogt, %6, %7 : vector<4x512xf32>
    %cst_6 = arith.constant 0.00999999977 : f32
    %9 = vector.broadcast %cst_6 : f32 to vector<4x512xf32>
    %10 = arith.mulf %9, %6 : vector<4x512xf32>
    %11 = arith.select %8, %6, %10 : vector<4x512xi1>, vector<4x512xf32>
    %12 = arith.truncf %11 : vector<4x512xf32> to vector<4x512xbf16>
    %c0_7 = arith.constant 0 : index
    %c0_8 = arith.constant 0 : index
    %13 = vector.load %arg4[%c0_7, %c0_8] : memref<512x128xbf16, #tpu.memory_space<vmem>>, vector<512x128xbf16>
    %cst_9 = arith.constant dense<0.000000e+00> : vector<4x128xf32>
    %14 = tpu.matmul %12, %13, %cst_9 {dimension_numbers = #tpu.dot_dimension_numbers<[1], [0], [0], [1], [0, 0, 1, 1], [], []>} : vector<4x512xbf16>, vector<512x128xbf16>, vector<4x128xf32> -> vector<4x128xf32>
    %c0_10 = arith.constant 0 : index
    %c0_11 = arith.constant 0 : index
    %15 = vector.load %arg5[%c0_10, %c0_11] : memref<1x128xf32, #tpu.memory_space<vmem>>, vector<1x128xf32>
    %16 = vector.broadcast %15 : vector<1x128xf32> to vector<4x128xf32>
    %17 = arith.addf %14, %16 : vector<4x128xf32>
    %cst_12 = arith.constant 0.000000e+00 : f32
    %18 = vector.broadcast %cst_12 : f32 to vector<4x128xf32>
    %19 = arith.cmpf ogt, %17, %18 : vector<4x128xf32>
    %cst_13 = arith.constant 0.00999999977 : f32
    %20 = vector.broadcast %cst_13 : f32 to vector<4x128xf32>
    %21 = arith.mulf %20, %17 : vector<4x128xf32>
    %22 = arith.select %19, %17, %21 : vector<4x128xi1>, vector<4x128xf32>
    %23 = arith.truncf %22 : vector<4x128xf32> to vector<4x128xbf16>
    %24 = tpu.concatenate %1, %23 in 1 : vector<4x32xbf16>, vector<4x128xbf16> -> vector<4x160xbf16>
    %c0_14 = arith.constant 0 : index
    %c0_15 = arith.constant 0 : index
    %25 = vector.load %arg6[%c0_14, %c0_15] : memref<160x128xbf16, #tpu.memory_space<vmem>>, vector<160x128xbf16>
    %cst_16 = arith.constant dense<0.000000e+00> : vector<4x128xf32>
    %26 = tpu.matmul %24, %25, %cst_16 {dimension_numbers = #tpu.dot_dimension_numbers<[1], [0], [0], [1], [0, 0, 1, 1], [], []>} : vector<4x160xbf16>, vector<160x128xbf16>, vector<4x128xf32> -> vector<4x128xf32>
    %c0_17 = arith.constant 0 : index
    %c0_18 = arith.constant 0 : index
    %27 = vector.load %arg7[%c0_17, %c0_18] : memref<1x128xf32, #tpu.memory_space<vmem>>, vector<1x128xf32>
    %28 = vector.broadcast %27 : vector<1x128xf32> to vector<4x128xf32>
    %29 = arith.addf %26, %28 : vector<4x128xf32>
    %30 = arith.negf %29 : vector<4x128xf32>
    %31 = math.exp %30 : vector<4x128xf32>
    %cst_19 = arith.constant 1.000000e+00 : f32
    %32 = vector.broadcast %cst_19 : f32 to vector<4x128xf32>
    %33 = arith.addf %32, %31 : vector<4x128xf32>
    %34 = arith.divf %32, %33 : vector<4x128xf32>
    %c0_20 = arith.constant 0 : index
    %c0_21 = arith.constant 0 : index
    %35 = vector.load %arg8[%c0_20, %c0_21] : memref<4x128xf32, #tpu.memory_space<vmem>>, vector<4x128xf32>
    tpu.vector_store %arg8[%c0_20, %c0_21], %34 {strides = array<i32>} : memref<4x128xf32, #tpu.memory_space<vmem>>, vector<4x128xf32>,
    return
  }
  func.func @transform_0(%arg0: i32) -> (i32, i32) {
    %c0_i32 = arith.constant 0 : i32
    %c0_i32_0 = arith.constant 0 : i32
    return %arg0, %c0_i32 : i32, i32
  }
  func.func @transform_1(%arg0: i32) -> (i32, i32) {
    %c0_i32 = arith.constant 0 : i32
    %c0_i32_0 = arith.constant 0 : i32
    %c0_i32_1 = arith.constant 0 : i32
    return %c0_i32, %c0_i32_0 : i32, i32
  }
  func.func @transform_2(%arg0: i32) -> (i32, i32) {
    %c0_i32 = arith.constant 0 : i32
    %c0_i32_0 = arith.constant 0 : i32
    %c0_i32_1 = arith.constant 0 : i32
    return %c0_i32, %c0_i32_0 : i32, i32
  }
  func.func @transform_3(%arg0: i32) -> (i32, i32) {
    %c0_i32 = arith.constant 0 : i32
    %c0_i32_0 = arith.constant 0 : i32
    %c0_i32_1 = arith.constant 0 : i32
    return %c0_i32, %c0_i32_0 : i32, i32
  }
  func.func @transform_4(%arg0: i32) -> (i32, i32) {
    %c0_i32 = arith.constant 0 : i32
    %c0_i32_0 = arith.constant 0 : i32
    %c0_i32_1 = arith.constant 0 : i32
    return %c0_i32, %c0_i32_0 : i32, i32
  }
  func.func @transform_5(%arg0: i32) -> (i32, i32) {
    %c0_i32 = arith.constant 0 : i32
    %c0_i32_0 = arith.constant 0 : i32
    %c0_i32_1 = arith.constant 0 : i32
    return %c0_i32, %c0_i32_0 : i32, i32
  }
  func.func @transform_6(%arg0: i32) -> (i32, i32) {
    %c0_i32 = arith.constant 0 : i32
    %c0_i32_0 = arith.constant 0 : i32
    %c0_i32_1 = arith.constant 0 : i32
    return %c0_i32, %c0_i32_0 : i32, i32
  }
  func.func @transform_7(%arg0: i32) -> (i32, i32) {
    %c0_i32 = arith.constant 0 : i32
    %c0_i32_0 = arith.constant 0 : i32
    return %arg0, %c0_i32 : i32, i32
  }
}

</mosaic_0001>

<llo_original>
// kernel: tpu_custom_call.1
$region0: #{tpu_custom_call.1}
  #allocation0 [shape = 'u32[]', space=smem, size = 0x4, offset = 0x4, fixed_abs, tag = 'smem constant byte address 0x4 - core index']
  #allocation1 [shape = 'u32[144,128]{1,0:T(1,128)}', space=vmem, size = 0x12000, scoped, tag = 'internal scratch']
  %s0 = inlined_call_operand.hbm [shape: f32[4,32], index: 0, kind: input, shape index: {}]
  %s1 = inlined_call_operand.hbm [shape: bf16[32,512], index: 1, kind: input, shape index: {}]
  %s2 = inlined_call_operand.vmem [shape: f32[1,512], index: 2, kind: input, shape index: {}]
  %s3 = inlined_call_operand.hbm [shape: bf16[512,128], index: 3, kind: input, shape index: {}]
  %s4 = inlined_call_operand.vmem [shape: f32[1,128], index: 4, kind: input, shape index: {}]
  %s5 = inlined_call_operand.hbm [shape: bf16[160,128], index: 5, kind: input, shape index: {}]
  %s6 = inlined_call_operand.vmem [shape: f32[1,128], index: 6, kind: input, shape index: {}]
  %s7 = inlined_call_operand.hbm [shape: f32[4,128], index: 7, kind: output, shape index: {}]
  %s8 = sld [smem:[#allocation0]]
  $region54: #{tpu_custom_call.1} parent=0
    _
  %s10 = ssub.s32 1, %s8
  %s11 = scalar_select 0, %s10, %s8
  $region1: #{tpu_custom_call.1} parent=0
    #allocation2 [shape = 'u8[2048]{0}', space=vmem, size = 0x800, scoped, tag = 'input window, operand 0, single buffered']
    #allocation3 [shape = 's32[1]{0}', space=sflag, size = 0x4, scoped, tag = 'scoped memory for tpu_custom_call.1']
    #allocation4 [shape = 's32[1]{0}', space=sflag, size = 0x4, scoped, tag = 'scoped memory for tpu_custom_call.1']
    #allocation5 [shape = 'u8[32768]{0}', space=vmem, size = 0x8000, scoped, tag = 'input window, operand 1, single buffered']
    #allocation6 [shape = 's32[1]{0}', space=sflag, size = 0x4, scoped, tag = 'scoped memory for tpu_custom_call.1']
    #allocation7 [shape = 'u8[131072]{0}', space=vmem, size = 0x20000, scoped, tag = 'input window, operand 3, single buffered']
    #allocation8 [shape = 'u8[40960]{0}', space=vmem, size = 0xa000, scoped, tag = 'input window, operand 5, single buffered']
    #allocation9 [shape = 's32[1]{0}', space=sflag, size = 0x4, scoped, tag = 'scoped memory for tpu_custom_call.1']
    #allocation10 [shape = 'u8[2048]{0}', space=vmem, size = 0x800, scoped, tag = 'output window, operand 0, single buffered']
    %12 = vsyncpa [#allocation3], 0
    %13 = vsyncpa [#allocation6], 0
    %14 = vsyncpa [#allocation9], 0
    %15 = vsyncpa [#allocation4], 0
    // Predicated region
    $region2: #{tpu_custom_call.1} parent=1 // pred_check
      _
    $region3: #{tpu_custom_call.1} parent=1 // pred_check_branch
      %17 = sbr.rel (0) target = $region5
    $region4: #{tpu_custom_call.1} parent=1 // pred_region
      %s19 = ssub.s32 64, 64
      %20 = vsyncadd [#allocation3], %s19
      %s22 = sshll.u32 [#allocation2], 4
      %s23 = int_to_ptr.vmem [resolvable:$true] %s22
      %25 = dma.hbm_to_vmem [thread:$0]  %s0, 64, %s23, [#allocation3]
    $region5: #{tpu_custom_call.1} parent=1 // pred_fallthru
      _
    // Predicated region
    $region6: #{tpu_custom_call.1} parent=1 // pred_check
      _
    $region7: #{tpu_custom_call.1} parent=1 // pred_check_branch
      %27 = sbr.rel (0) target = $region9
    $region8: #{tpu_custom_call.1} parent=1 // pred_region
      %s29 = ssub.s32 1024, 1024
      %30 = vsyncadd [#allocation6], %s29
      %s31 = sshll.u32 [#allocation5], 4
      %s32 = int_to_ptr.vmem [resolvable:$true] %s31
      %37 = dma.hbm_to_vmem [thread:$0]  %s1, 1024, %s32, [#allocation6], 256, 256, 16
    $region9: #{tpu_custom_call.1} parent=1 // pred_fallthru
      _
    // Predicated region
    $region10: #{tpu_custom_call.1} parent=1 // pred_check
      _
    $region11: #{tpu_custom_call.1} parent=1 // pred_check_branch
      %39 = sbr.rel (0) target = $region13
    $region12: #{tpu_custom_call.1} parent=1 // pred_region
      _
    $region13: #{tpu_custom_call.1} parent=1 // pred_fallthru
      _
    // Predicated region
    $region14: #{tpu_custom_call.1} parent=1 // pred_check
      _
    $region15: #{tpu_custom_call.1} parent=1 // pred_check_branch
      %41 = sbr.rel (0) target = $region17
    $region16: #{tpu_custom_call.1} parent=1 // pred_region
      %s43 = ssub.s32 4096, 4096
      %44 = vsyncadd [#allocation6], %s43
      %s45 = sshll.u32 [#allocation7], 4
      %s46 = int_to_ptr.vmem [resolvable:$true] %s45
      %51 = dma.hbm_to_vmem [thread:$0]  %s3, 4096, %s46, [#allocation6], 64, 64, 4
    $region17: #{tpu_custom_call.1} parent=1 // pred_fallthru
      _
    // Predicated region
    $region18: #{tpu_custom_call.1} parent=1 // pred_check
      _
    $region19: #{tpu_custom_call.1} parent=1 // pred_check_branch
      %53 = sbr.rel (0) target = $region21
    $region20: #{tpu_custom_call.1} parent=1 // pred_region
      _
    $region21: #{tpu_custom_call.1} parent=1 // pred_fallthru
      _
    // Predicated region
    $region22: #{tpu_custom_call.1} parent=1 // pred_check
      _
    $region23: #{tpu_custom_call.1} parent=1 // pred_check_branch
      %55 = sbr.rel (0) target = $region25
    $region24: #{tpu_custom_call.1} parent=1 // pred_region
      %s57 = ssub.s32 1280, 1280
      %58 = vsyncadd [#allocation9], %s57
      %s59 = sshll.u32 [#allocation8], 4
      %s60 = int_to_ptr.vmem [resolvable:$true] %s59
      %65 = dma.hbm_to_vmem [thread:$0]  %s5, 1280, %s60, [#allocation9], 64, 64, 4
    $region25: #{tpu_custom_call.1} parent=1 // pred_fallthru
      _
    // Predicated region
    $region26: #{tpu_custom_call.1} parent=1 // pred_check
      _
    $region27: #{tpu_custom_call.1} parent=1 // pred_check_branch
      %67 = sbr.rel (0) target = $region29
    $region28: #{tpu_custom_call.1} parent=1 // pred_region
      _
    $region29: #{tpu_custom_call.1} parent=1 // pred_fallthru
      _
    // Predicated region
    $region30: #{tpu_custom_call.1} parent=1 // pred_check
      _
    $region31: #{tpu_custom_call.1} parent=1 // pred_check_branch
      %69 = sbr.rel (0) target = $region33
    $region32: #{tpu_custom_call.1} parent=1 // pred_region
      %70 = dma.done [#allocation3], 64
    $region33: #{tpu_custom_call.1} parent=1 // pred_fallthru
      _
    // Predicated region
    $region34: #{tpu_custom_call.1} parent=1 // pred_check
      _
    $region35: #{tpu_custom_call.1} parent=1 // pred_check_branch
      %72 = sbr.rel (0) target = $region37
    $region36: #{tpu_custom_call.1} parent=1 // pred_region
      %73 = dma.done [#allocation6], 1024
    $region37: #{tpu_custom_call.1} parent=1 // pred_fallthru
      _
    // Predicated region
    $region38: #{tpu_custom_call.1} parent=1 // pred_check
      _
    $region39: #{tpu_custom_call.1} parent=1 // pred_check_branch
      %75 = sbr.rel (0) target = $region41
    $region40: #{tpu_custom_call.1} parent=1 // pred_region
      %76 = dma.done [#allocation6], 4096
    $region41: #{tpu_custom_call.1} parent=1 // pred_fallthru
      _
    // Predicated region
    $region42: #{tpu_custom_call.1} parent=1 // pred_check
      _
    $region43: #{tpu_custom_call.1} parent=1 // pred_check_branch
      %78 = sbr.rel (0) target = $region45
    $region44: #{tpu_custom_call.1} parent=1 // pred_region
      %79 = dma.done [#allocation9], 1280
    $region45: #{tpu_custom_call.1} parent=1 // pred_fallthru
      _
    %v81 = vld [vmem:[#allocation2] sm:$0xf]
    %v82 = vpack.c.bf16 %v81, %v81
    %v83 = vld [vmem:[#allocation5] sm:$0xff]
    %v84 = vld [vmem:[#allocation5 + $0x8] sm:$0xff]
    %v85 = vld [vmem:[#allocation5 + $0x10] sm:$0xff]
    %v86 = vld [vmem:[#allocation5 + $0x18] sm:$0xff]
    %v87 = vld [vmem:[#allocation5 + $0x20] sm:$0xff]
    %v88 = vld [vmem:[#allocation5 + $0x28] sm:$0xff]
    %v89 = vld [vmem:[#allocation5 + $0x30] sm:$0xff]
    %v90 = vld [vmem:[#allocation5 + $0x38] sm:$0xff]
    %v91 = vld [vmem:[%s2] sm:$0xf]
    %v93 = vlaneseq
    %v94 = vshrl.u32 %v93, 7
    %v95 = vsub.s32 0, %v94
    %v96 = vrot.slane %v91, %v95
    %v97 = vlaneseq
    %v98 = vshrl.u32 %v97, 7
    %v99 = vsub.s32 1, %v98
    %v100 = vrot.slane %v91, %v99
    %v101 = vlaneseq
    %v102 = vshrl.u32 %v101, 7
    %v103 = vsub.s32 2, %v102
    %v104 = vrot.slane %v91, %v103
    %v105 = vlaneseq
    %v106 = vshrl.u32 %v105, 7
    %v107 = vsub.s32 3, %v106
    %v108 = vrot.slane %v91, %v107
    %v121 = vunpack.c.l.b16 %v83
    %v122 = vunpack.c.h.b16 %v83
    %v123 = vunpack.c.l.b16 %v84
    %v124 = vunpack.c.h.b16 %v84
    %v125 = vunpack.c.l.b16 %v85
    %v126 = vunpack.c.h.b16 %v85
    %v127 = vunpack.c.l.b16 %v86
    %v128 = vunpack.c.h.b16 %v86
    %v129 = vunpack.c.l.b16 %v87
    %v130 = vunpack.c.h.b16 %v87
    %v131 = vunpack.c.l.b16 %v88
    %v132 = vunpack.c.h.b16 %v88
    %v133 = vunpack.c.l.b16 %v89
    %v134 = vunpack.c.h.b16 %v89
    %v135 = vunpack.c.l.b16 %v90
    %v136 = vunpack.c.h.b16 %v90
    %v137 = vpack.c.b16 %v125, %v121
    %v138 = vpack.c.b16 %v126, %v122
    %v139 = vpack.c.b16 %v127, %v123
    %v140 = vpack.c.b16 %v128, %v124
    %v141 = vpack.c.b16 %v133, %v129
    %v142 = vpack.c.b16 %v134, %v130
    %v143 = vpack.c.b16 %v135, %v131
    %v144 = vpack.c.b16 %v136, %v132
    %vm153 = vcmask 261120
    %v155 = vsel %vm153, %v82, 0
    %157 = vmatprep.subr.bf16.mxu0 %v138
    %158 = vmatpush1.bf16.msra.mxu0 %v137
    %159 = vmatprep.subr.bf16.mxu0 %v142
    %160 = vmatpush1.bf16.msra.mxu0 %v141
    %161 = vmatprep.subr.bf16.mxu0 0
    %162 = vmatpush1.bf16.msra.mxu0 0
    %163 = vmatprep.subr.bf16.mxu0 0
    %164 = vmatpush1.bf16.msra.mxu0 0
    %165 = vmatprep.subr.bf16.mxu0 0
    %166 = vmatpush1.bf16.msra.mxu0 0
    %167 = vmatprep.subr.bf16.mxu0 0
    %168 = vmatpush1.bf16.msra.mxu0 0
    %169 = vmatprep.subr.bf16.mxu0 0
    %170 = vmatpush1.bf16.msra.mxu0 0
    %171 = vmatprep.subr.bf16.mxu0 0
    %172 = vmatpush1.bf16.msra.mxu0 0
    %173 = vmatprep.subr.bf16.mxu0 0
    %174 = vmatpush1.bf16.msra.mxu0 0
    %175 = vmatprep.subr.bf16.mxu0 0
    %176 = vmatpush1.bf16.msra.mxu0 0
    %177 = vmatprep.subr.bf16.mxu0 0
    %178 = vmatpush1.bf16.msra.mxu0 0
    %179 = vmatprep.subr.bf16.mxu0 0
    %180 = vmatpush1.bf16.msra.mxu0 0
    %181 = vmatprep.subr.bf16.mxu0 0
    %182 = vmatpush1.bf16.msra.mxu0 0
    %183 = vmatprep.subr.bf16.mxu0 0
    %184 = vmatpush1.bf16.msra.mxu0 0
    %185 = vmatprep.subr.bf16.mxu0 0
    %186 = vmatpush1.bf16.msra.mxu0 0
    %187 = vmatprep.subr.bf16.mxu0 0
    %188 = vmatpush1.bf16.msra.mxu0 0
    %189 = vmatprep.mubr.bf16.mxu0 0
    %190 = vmatmul.mubr.bf16.gmra.mrb[0].mxu0 %v155
    %v191 = vpop.f32.mrb[0].mxu0
    %v192 = vadd.f32 %v96, %v191
    %v193 = vpop.f32.mrb[0].mxu0
    %v194 = vadd.f32 %v100, %v193
    %v195 = vpop.f32.mrb[0].mxu0
    %v196 = vpop.f32.mrb[0].mxu0
    %197 = vdwg.mxu0
    %198 = vmatprep.subr.bf16.mxu0 %v140
    %199 = vmatpush1.bf16.msra.mxu0 %v139
    %200 = vmatprep.subr.bf16.mxu0 %v144
    %201 = vmatpush1.bf16.msra.mxu0 %v143
    %202 = vmatprep.subr.bf16.mxu0 0
    %203 = vmatpush1.bf16.msra.mxu0 0
    %204 = vmatprep.subr.bf16.mxu0 0
    %205 = vmatpush1.bf16.msra.mxu0 0
    %206 = vmatprep.subr.bf16.mxu0 0
    %207 = vmatpush1.bf16.msra.mxu0 0
    %208 = vmatprep.subr.bf16.mxu0 0
    %209 = vmatpush1.bf16.msra.mxu0 0
    %210 = vmatprep.subr.bf16.mxu0 0
    %211 = vmatpush1.bf16.msra.mxu0 0
    %212 = vmatprep.subr.bf16.mxu0 0
    %213 = vmatpush1.bf16.msra.mxu0 0
    %214 = vmatprep.subr.bf16.mxu0 0
    %215 = vmatpush1.bf16.msra.mxu0 0
    %216 = vmatprep.subr.bf16.mxu0 0
    %217 = vmatpush1.bf16.msra.mxu0 0
    %218 = vmatprep.subr.bf16.mxu0 0
    %219 = vmatpush1.bf16.msra.mxu0 0
    %220 = vmatprep.subr.bf16.mxu0 0
    %221 = vmatpush1.bf16.msra.mxu0 0
    %222 = vmatprep.subr.bf16.mxu0 0
    %223 = vmatpush1.bf16.msra.mxu0 0
    %224 = vmatprep.subr.bf16.mxu0 0
    %225 = vmatpush1.bf16.msra.mxu0 0
    %226 = vmatprep.subr.bf16.mxu0 0
    %227 = vmatpush1.bf16.msra.mxu0 0
    %228 = vmatprep.subr.bf16.mxu0 0
    %229 = vmatpush1.bf16.msra.mxu0 0
    %230 = vmatprep.mubr.bf16.mxu0 0
    %231 = vmatmul.mubr.bf16.gmra.mrb[0].mxu0 %v155
    %v232 = vpop.f32.mrb[0].mxu0
    %v233 = vadd.f32 %v104, %v232
    %v234 = vpop.f32.mrb[0].mxu0
    %v235 = vadd.f32 %v108, %v234
    %v236 = vpop.f32.mrb[0].mxu0
    %v237 = vpop.f32.mrb[0].mxu0
    %238 = vdwg.mxu0
    %vm239 = vcmp.gt.f32.partialorder %v192, 0.0
    %vm240 = vcmp.gt.f32.partialorder %v194, 0.0
    %vm241 = vcmp.gt.f32.partialorder %v233, 0.0
    %vm242 = vcmp.gt.f32.partialorder %v235, 0.0
    %v243 = vmul.f32 %v192, 0.01
    %v244 = vmul.f32 %v194, 0.01
    %v245 = vmul.f32 %v233, 0.01
    %v246 = vmul.f32 %v235, 0.01
    %v247 = vsel %vm239, %v192, %v243
    %v248 = vsel %vm240, %v194, %v244
    %v249 = vsel %vm241, %v233, %v245
    %v250 = vsel %vm242, %v235, %v246
    %v251 = vpack.c.bf16 %v247, %v247
    %v252 = vpack.c.bf16 %v248, %v248
    %v253 = vpack.c.bf16 %v249, %v249
    %v254 = vpack.c.bf16 %v250, %v250
    %v255 = vld [vmem:[#allocation7] sm:$0xf]
    %v256 = vld [vmem:[#allocation7 + $0x4] sm:$0xf]
    %v257 = vld [vmem:[#allocation7 + $0x8] sm:$0xf]
    %v258 = vld [vmem:[#allocation7 + $0xc] sm:$0xf]
    %v259 = vld [vmem:[#allocation7 + $0x10] sm:$0xf]
    %v260 = vld [vmem:[#allocation7 + $0x14] sm:$0xf]
    %v261 = vld [vmem:[#allocation7 + $0x18] sm:$0xf]
    %v262 = vld [vmem:[#allocation7 + $0x1c] sm:$0xf]
    %v263 = vld [vmem:[#allocation7 + $0x20] sm:$0xf]
    %v264 = vld [vmem:[#allocation7 + $0x24] sm:$0xf]
    %v265 = vld [vmem:[#allocation7 + $0x28] sm:$0xf]
    %v266 = vld [vmem:[#allocation7 + $0x2c] sm:$0xf]
    %v267 = vld [vmem:[#allocation7 + $0x30] sm:$0xf]
    %v268 = vld [vmem:[#allocation7 + $0x34] sm:$0xf]
    %v269 = vld [vmem:[#allocation7 + $0x38] sm:$0xf]
    %v270 = vld [vmem:[#allocation7 + $0x3c] sm:$0xf]
    %v271 = vld [vmem:[#allocation7 + $0x40] sm:$0xf]
    %v272 = vld [vmem:[#allocation7 + $0x44] sm:$0xf]
    %v273 = vld [vmem:[#allocation7 + $0x48] sm:$0xf]
    %v274 = vld [vmem:[#allocation7 + $0x4c] sm:$0xf]
    %v275 = vld [vmem:[#allocation7 + $0x50] sm:$0xf]
    %v276 = vld [vmem:[#allocation7 + $0x54] sm:$0xf]
    %v277 = vld [vmem:[#allocation7 + $0x58] sm:$0xf]
    %v278 = vld [vmem:[#allocation7 + $0x5c] sm:$0xf]
    %v279 = vld [vmem:[#allocation7 + $0x60] sm:$0xf]
    %v280 = vld [vmem:[#allocation7 + $0x64] sm:$0xf]
    %v281 = vld [vmem:[#allocation7 + $0x68] sm:$0xf]
    %v282 = vld [vmem:[#allocation7 + $0x6c] sm:$0xf]
    %v283 = vld [vmem:[#allocation7 + $0x70] sm:$0xf]
    %v284 = vld [vmem:[#allocation7 + $0x74] sm:$0xf]
    %v285 = vld [vmem:[#allocation7 + $0x78] sm:$0xf]
    %v286 = vld [vmem:[#allocation7 + $0x7c] sm:$0xf]
    %v287 = vld [vmem:[#allocation7 + $0x80] sm:$0xf]
    %v288 = vld [vmem:[#allocation7 + $0x84] sm:$0xf]
    %v289 = vld [vmem:[#allocation7 + $0x88] sm:$0xf]
    %v290 = vld [vmem:[#allocation7 + $0x8c] sm:$0xf]
    %v291 = vld [vmem:[#allocation7 + $0x90] sm:$0xf]
    %v292 = vld [vmem:[#allocation7 + $0x94] sm:$0xf]
    %v293 = vld [vmem:[#allocation7 + $0x98] sm:$0xf]
    %v294 = vld [vmem:[#allocation7 + $0x9c] sm:$0xf]
    %v295 = vld [vmem:[#allocation7 + $0xa0] sm:$0xf]
    %v296 = vld [vmem:[#allocation7 + $0xa4] sm:$0xf]
    %v297 = vld [vmem:[#allocation7 + $0xa8] sm:$0xf]
    %v298 = vld [vmem:[#allocation7 + $0xac] sm:$0xf]
    %v299 = vld [vmem:[#allocation7 + $0xb0] sm:$0xf]
    %v300 = vld [vmem:[#allocation7 + $0xb4] sm:$0xf]
    %v301 = vld [vmem:[#allocation7 + $0xb8] sm:$0xf]
    %v302 = vld [vmem:[#allocation7 + $0xbc] sm:$0xf]
    %v303 = vld [vmem:[#allocation7 + $0xc0] sm:$0xf]
    %v304 = vld [vmem:[#allocation7 + $0xc4] sm:$0xf]
    %v305 = vld [vmem:[#allocation7 + $0xc8] sm:$0xf]
    %v306 = vld [vmem:[#allocation7 + $0xcc] sm:$0xf]
    %v307 = vld [vmem:[#allocation7 + $0xd0] sm:$0xf]
    %v308 = vld [vmem:[#allocation7 + $0xd4] sm:$0xf]
    %v309 = vld [vmem:[#allocation7 + $0xd8] sm:$0xf]
    %v310 = vld [vmem:[#allocation7 + $0xdc] sm:$0xf]
    %v311 = vld [vmem:[#allocation7 + $0xe0] sm:$0xf]
    %v312 = vld [vmem:[#allocation7 + $0xe4] sm:$0xf]
    %v313 = vld [vmem:[#allocation7 + $0xe8] sm:$0xf]
    %v314 = vld [vmem:[#allocation7 + $0xec] sm:$0xf]
    %v315 = vld [vmem:[#allocation7 + $0xf0] sm:$0xf]
    %v316 = vld [vmem:[#allocation7 + $0xf4] sm:$0xf]
    %v317 = vld [vmem:[#allocation7 + $0xf8] sm:$0xf]
    %v318 = vld [vmem:[#allocation7 + $0xfc] sm:$0xf]
    %v319 = vld [vmem:[%s4] sm:$0x1]
    %v321 = vlaneseq
    %v322 = vshrl.u32 %v321, 7
    %v323 = vsub.s32 0, %v322
    %v324 = vrot.slane %v319, %v323
    %v390 = vunpack.c.l.b16 %v255
    %v391 = vunpack.c.l.b16 %v256
    %v392 = vunpack.c.l.b16 %v257
    %v393 = vunpack.c.l.b16 %v258
    %v394 = vunpack.c.l.b16 %v259
    %v395 = vunpack.c.l.b16 %v260
    %v396 = vunpack.c.l.b16 %v261
    %v397 = vunpack.c.l.b16 %v262
    %v398 = vunpack.c.l.b16 %v263
    %v399 = vunpack.c.l.b16 %v264
    %v400 = vunpack.c.l.b16 %v265
    %v401 = vunpack.c.l.b16 %v266
    %v402 = vunpack.c.l.b16 %v267
    %v403 = vunpack.c.l.b16 %v268
    %v404 = vunpack.c.l.b16 %v269
    %v405 = vunpack.c.l.b16 %v270
    %v406 = vunpack.c.l.b16 %v271
    %v407 = vunpack.c.l.b16 %v272
    %v408 = vunpack.c.l.b16 %v273
    %v409 = vunpack.c.l.b16 %v274
    %v410 = vunpack.c.l.b16 %v275
    %v411 = vunpack.c.l.b16 %v276
    %v412 = vunpack.c.l.b16 %v277
    %v413 = vunpack.c.l.b16 %v278
    %v414 = vunpack.c.l.b16 %v279
    %v415 = vunpack.c.l.b16 %v280
    %v416 = vunpack.c.l.b16 %v281
    %v417 = vunpack.c.l.b16 %v282
    %v418 = vunpack.c.l.b16 %v283
    %v419 = vunpack.c.l.b16 %v284
    %v420 = vunpack.c.l.b16 %v285
    %v421 = vunpack.c.l.b16 %v286
    %v422 = vunpack.c.l.b16 %v287
    %v423 = vunpack.c.l.b16 %v288
    %v424 = vunpack.c.l.b16 %v289
    %v425 = vunpack.c.l.b16 %v290
    %v426 = vunpack.c.l.b16 %v291
    %v427 = vunpack.c.l.b16 %v292
    %v428 = vunpack.c.l.b16 %v293
    %v429 = vunpack.c.l.b16 %v294
    %v430 = vunpack.c.l.b16 %v295
    %v431 = vunpack.c.l.b16 %v296
    %v432 = vunpack.c.l.b16 %v297
    %v433 = vunpack.c.l.b16 %v298
    %v434 = vunpack.c.l.b16 %v299
    %v435 = vunpack.c.l.b16 %v300
    %v436 = vunpack.c.l.b16 %v301
    %v437 = vunpack.c.l.b16 %v302
    %v438 = vunpack.c.l.b16 %v303
    %v439 = vunpack.c.l.b16 %v304
    %v440 = vunpack.c.l.b16 %v305
    %v441 = vunpack.c.l.b16 %v306
    %v442 = vunpack.c.l.b16 %v307
    %v443 = vunpack.c.l.b16 %v308
    %v444 = vunpack.c.l.b16 %v309
    %v445 = vunpack.c.l.b16 %v310
    %v446 = vunpack.c.l.b16 %v311
    %v447 = vunpack.c.l.b16 %v312
    %v448 = vunpack.c.l.b16 %v313
    %v449 = vunpack.c.l.b16 %v314
    %v450 = vunpack.c.l.b16 %v315
    %v451 = vunpack.c.l.b16 %v316
    %v452 = vunpack.c.l.b16 %v317
    %v453 = vunpack.c.l.b16 %v318
    %v454 = vpack.c.b16 %v391, %v390
    %v455 = vpack.c.b16 %v393, %v392
    %v456 = vpack.c.b16 %v395, %v394
    %v457 = vpack.c.b16 %v397, %v396
    %v458 = vpack.c.b16 %v399, %v398
    %v459 = vpack.c.b16 %v401, %v400
    %v460 = vpack.c.b16 %v403, %v402
    %v461 = vpack.c.b16 %v405, %v404
    %v462 = vpack.c.b16 %v407, %v406
    %v463 = vpack.c.b16 %v409, %v408
    %v464 = vpack.c.b16 %v411, %v410
    %v465 = vpack.c.b16 %v413, %v412
    %v466 = vpack.c.b16 %v415, %v414
    %v467 = vpack.c.b16 %v417, %v416
    %v468 = vpack.c.b16 %v419, %v418
    %v469 = vpack.c.b16 %v421, %v420
    %v470 = vpack.c.b16 %v423, %v422
    %v471 = vpack.c.b16 %v425, %v424
    %v472 = vpack.c.b16 %v427, %v426
    %v473 = vpack.c.b16 %v429, %v428
    %v474 = vpack.c.b16 %v431, %v430
    %v475 = vpack.c.b16 %v433, %v432
    %v476 = vpack.c.b16 %v435, %v434
    %v477 = vpack.c.b16 %v437, %v436
    %v478 = vpack.c.b16 %v439, %v438
    %v479 = vpack.c.b16 %v441, %v440
    %v480 = vpack.c.b16 %v443, %v442
    %v481 = vpack.c.b16 %v445, %v444
    %v482 = vpack.c.b16 %v447, %v446
    %v483 = vpack.c.b16 %v449, %v448
    %v484 = vpack.c.b16 %v451, %v450
    %v485 = vpack.c.b16 %v453, %v452
    %518 = vmatprep.subr.bf16.mxu0 0
    %519 = vmatpush1.bf16.msra.mxu0 %v454
    %520 = vmatprep.subr.bf16.mxu0 0
    %521 = vmatpush1.bf16.msra.mxu0 %v455
    %522 = vmatprep.subr.bf16.mxu0 0
    %523 = vmatpush1.bf16.msra.mxu0 %v456
    %524 = vmatprep.subr.bf16.mxu0 0
    %525 = vmatpush1.bf16.msra.mxu0 %v457
    %526 = vmatprep.subr.bf16.mxu0 0
    %527 = vmatpush1.bf16.msra.mxu0 %v458
    %528 = vmatprep.subr.bf16.mxu0 0
    %529 = vmatpush1.bf16.msra.mxu0 %v459
    %530 = vmatprep.subr.bf16.mxu0 0
    %531 = vmatpush1.bf16.msra.mxu0 %v460
    %532 = vmatprep.subr.bf16.mxu0 0
    %533 = vmatpush1.bf16.msra.mxu0 %v461
    %534 = vmatprep.subr.bf16.mxu0 0
    %535 = vmatpush1.bf16.msra.mxu0 %v462
    %536 = vmatprep.subr.bf16.mxu0 0
    %537 = vmatpush1.bf16.msra.mxu0 %v463
    %538 = vmatprep.subr.bf16.mxu0 0
    %539 = vmatpush1.bf16.msra.mxu0 %v464
    %540 = vmatprep.subr.bf16.mxu0 0
    %541 = vmatpush1.bf16.msra.mxu0 %v465
    %542 = vmatprep.subr.bf16.mxu0 0
    %543 = vmatpush1.bf16.msra.mxu0 %v466
    %544 = vmatprep.subr.bf16.mxu0 0
    %545 = vmatpush1.bf16.msra.mxu0 %v467
    %546 = vmatprep.subr.bf16.mxu0 0
    %547 = vmatpush1.bf16.msra.mxu0 %v468
    %548 = vmatprep.subr.bf16.mxu0 0
    %549 = vmatpush1.bf16.msra.mxu0 %v469
    %550 = vmatprep.mubr.bf16.mxu0 %v252
    %551 = vmatmul.mubr.bf16.gmra.mrb[0].mxu0 %v251
    %v552 = vpop.f32.mrb[0].mxu0
    %v553 = vadd.f32 %v324, %v552
    %v554 = vpop.f32.mrb[0].mxu0
    %v555 = vpop.f32.mrb[0].mxu0
    %v556 = vpop.f32.mrb[0].mxu0
    %557 = vdwg.mxu0
    %558 = vmatprep.subr.bf16.mxu0 0
    %559 = vmatpush1.bf16.msra.mxu0 %v470
    %560 = vmatprep.subr.bf16.mxu0 0
    %561 = vmatpush1.bf16.msra.mxu0 %v471
    %562 = vmatprep.subr.bf16.mxu0 0
    %563 = vmatpush1.bf16.msra.mxu0 %v472
    %564 = vmatprep.subr.bf16.mxu0 0
    %565 = vmatpush1.bf16.msra.mxu0 %v473
    %566 = vmatprep.subr.bf16.mxu0 0
    %567 = vmatpush1.bf16.msra.mxu0 %v474
    %568 = vmatprep.subr.bf16.mxu0 0
    %569 = vmatpush1.bf16.msra.mxu0 %v475
    %570 = vmatprep.subr.bf16.mxu0 0
    %571 = vmatpush1.bf16.msra.mxu0 %v476
    %572 = vmatprep.subr.bf16.mxu0 0
    %573 = vmatpush1.bf16.msra.mxu0 %v477
    %574 = vmatprep.subr.bf16.mxu0 0
    %575 = vmatpush1.bf16.msra.mxu0 %v478
    %576 = vmatprep.subr.bf16.mxu0 0
    %577 = vmatpush1.bf16.msra.mxu0 %v479
    %578 = vmatprep.subr.bf16.mxu0 0
    %579 = vmatpush1.bf16.msra.mxu0 %v480
    %580 = vmatprep.subr.bf16.mxu0 0
    %581 = vmatpush1.bf16.msra.mxu0 %v481
    %582 = vmatprep.subr.bf16.mxu0 0
    %583 = vmatpush1.bf16.msra.mxu0 %v482
    %584 = vmatprep.subr.bf16.mxu0 0
    %585 = vmatpush1.bf16.msra.mxu0 %v483
    %586 = vmatprep.subr.bf16.mxu0 0
    %587 = vmatpush1.bf16.msra.mxu0 %v484
    %588 = vmatprep.subr.bf16.mxu0 0
    %589 = vmatpush1.bf16.msra.mxu0 %v485
    %590 = vmatprep.mubr.bf16.mxu0 %v254
    %591 = vmatmul.mubr.bf16.gmra.mrb[0].mxu0 %v253
    %v592 = vpop.f32.mrb[0].mxu0
    %v593 = vadd.f32 %v553, %v592
    %v594 = vpop.f32.mrb[0].mxu0
    %v595 = vpop.f32.mrb[0].mxu0
    %v596 = vpop.f32.mrb[0].mxu0
    %597 = vdwg.mxu0
    %vm598 = vcmp.gt.f32.partialorder %v593, 0.0
    %v599 = vmul.f32 %v593, 0.01
    %v600 = vsel %vm598, %v593, %v599
    %v601 = vpack.c.bf16 %v600, %v600
    %603 = vrot.lane.b32.xlu0 %v601, 32
    %v604 = vpop.permute.xlu0 %603
    %v606 = vsel %vm153, %v82, %v604
    %v608 = vld [vmem:[#allocation8] sm:$0xf]
    %v609 = vld [vmem:[#allocation8 + $0x4] sm:$0xf]
    %v610 = vld [vmem:[#allocation8 + $0x8] sm:$0xf]
    %v611 = vld [vmem:[#allocation8 + $0xc] sm:$0xf]
    %v612 = vld [vmem:[#allocation8 + $0x10] sm:$0xf]
    %v613 = vld [vmem:[#allocation8 + $0x14] sm:$0xf]
    %v614 = vld [vmem:[#allocation8 + $0x18] sm:$0xf]
    %v615 = vld [vmem:[#allocation8 + $0x1c] sm:$0xf]
    %v616 = vld [vmem:[#allocation8 + $0x20] sm:$0xf]
    %v617 = vld [vmem:[#allocation8 + $0x24] sm:$0xf]
    %v618 = vld [vmem:[#allocation8 + $0x28] sm:$0xf]
    %v619 = vld [vmem:[#allocation8 + $0x2c] sm:$0xf]
    %v620 = vld [vmem:[#allocation8 + $0x30] sm:$0xf]
    %v621 = vld [vmem:[#allocation8 + $0x34] sm:$0xf]
    %v622 = vld [vmem:[#allocation8 + $0x38] sm:$0xf]
    %v623 = vld [vmem:[#allocation8 + $0x3c] sm:$0xf]
    %v624 = vld [vmem:[#allocation8 + $0x40] sm:$0xf]
    %v625 = vld [vmem:[#allocation8 + $0x44] sm:$0xf]
    %v626 = vld [vmem:[#allocation8 + $0x48] sm:$0xf]
    %v627 = vld [vmem:[#allocation8 + $0x4c] sm:$0xf]
    %v628 = vld [vmem:[%s6] sm:$0x1]
    %v630 = vlaneseq
    %v631 = vshrl.u32 %v630, 7
    %v632 = vsub.s32 0, %v631
    %v633 = vrot.slane %v628, %v632
    %v655 = vunpack.c.l.b16 %v608
    %v656 = vunpack.c.l.b16 %v609
    %v657 = vunpack.c.l.b16 %v610
    %v658 = vunpack.c.l.b16 %v611
    %v659 = vunpack.c.l.b16 %v612
    %v660 = vunpack.c.l.b16 %v613
    %v661 = vunpack.c.l.b16 %v614
    %v662 = vunpack.c.l.b16 %v615
    %v663 = vunpack.c.l.b16 %v616
    %v664 = vunpack.c.l.b16 %v617
    %v665 = vunpack.c.l.b16 %v618
    %v666 = vunpack.c.l.b16 %v619
    %v667 = vunpack.c.l.b16 %v620
    %v668 = vunpack.c.l.b16 %v621
    %v669 = vunpack.c.l.b16 %v622
    %v670 = vunpack.c.l.b16 %v623
    %v671 = vunpack.c.l.b16 %v624
    %v672 = vunpack.c.l.b16 %v625
    %v673 = vunpack.c.l.b16 %v626
    %v674 = vunpack.c.l.b16 %v627
    %v675 = vpack.c.b16 %v656, %v655
    %v676 = vpack.c.b16 %v658, %v657
    %v677 = vpack.c.b16 %v660, %v659
    %v678 = vpack.c.b16 %v662, %v661
    %v679 = vpack.c.b16 %v664, %v663
    %v680 = vpack.c.b16 %v666, %v665
    %v681 = vpack.c.b16 %v668, %v667
    %v682 = vpack.c.b16 %v670, %v669
    %v683 = vpack.c.b16 %v672, %v671
    %v684 = vpack.c.b16 %v674, %v673
    %v695 = vsel %vm153, %v604, 0
    %697 = vmatprep.subr.bf16.mxu0 0
    %698 = vmatpush1.bf16.msra.mxu0 %v675
    %699 = vmatprep.subr.bf16.mxu0 0
    %700 = vmatpush1.bf16.msra.mxu0 %v676
    %701 = vmatprep.subr.bf16.mxu0 0
    %702 = vmatpush1.bf16.msra.mxu0 %v677
    %703 = vmatprep.subr.bf16.mxu0 0
    %704 = vmatpush1.bf16.msra.mxu0 %v678
    %705 = vmatprep.subr.bf16.mxu0 0
    %706 = vmatpush1.bf16.msra.mxu0 %v679
    %707 = vmatprep.subr.bf16.mxu0 0
    %708 = vmatpush1.bf16.msra.mxu0 %v680
    %709 = vmatprep.subr.bf16.mxu0 0
    %710 = vmatpush1.bf16.msra.mxu0 %v681
    %711 = vmatprep.subr.bf16.mxu0 0
    %712 = vmatpush1.bf16.msra.mxu0 %v682
    %713 = vmatprep.subr.bf16.mxu0 0
    %714 = vmatpush1.bf16.msra.mxu0 %v683
    %715 = vmatprep.subr.bf16.mxu0 0
    %716 = vmatpush1.bf16.msra.mxu0 %v684
    %717 = vmatprep.subr.bf16.mxu0 0
    %718 = vmatpush1.bf16.msra.mxu0 0
    %719 = vmatprep.subr.bf16.mxu0 0
    %720 = vmatpush1.bf16.msra.mxu0 0
    %721 = vmatprep.subr.bf16.mxu0 0
    %722 = vmatpush1.bf16.msra.mxu0 0
    %723 = vmatprep.subr.bf16.mxu0 0
    %724 = vmatpush1.bf16.msra.mxu0 0
    %725 = vmatprep.subr.bf16.mxu0 0
    %726 = vmatpush1.bf16.msra.mxu0 0
    %727 = vmatprep.subr.bf16.mxu0 0
    %728 = vmatpush1.bf16.msra.mxu0 0
    %729 = vmatprep.mubr.bf16.mxu0 %v695
    %730 = vmatmul.mubr.bf16.gmra.mrb[0].mxu0 %v606
    %v731 = vpop.f32.mrb[0].mxu0
    %v732 = vadd.f32 %v633, %v731
    %v733 = vpop.f32.mrb[0].mxu0
    %v734 = vpop.f32.mrb[0].mxu0
    %v735 = vpop.f32.mrb[0].mxu0
    %736 = vdwg.mxu0
    %v737 = vxor.u32 %v732, 2147483648
    %v738 = vmul.f32 %v737, 1.442695
    %v739 = vpow.pop %v738
    %v740 = vadd.f32 %v739, 1.0
    %v741 = vrcp.pop %v740
    %v742 = vmul.f32 1.0, %v741
    %743 = vst [vmem:[#allocation10] sm:$0xf] %v742
    // Predicated region
    $region46: #{tpu_custom_call.1} parent=1 // pred_check
      _
    $region47: #{tpu_custom_call.1} parent=1 // pred_check_branch
      %745 = sbr.rel (0) target = $region49
    $region48: #{tpu_custom_call.1} parent=1 // pred_region
      %s747 = ssub.s32 64, 64
      %748 = vsyncadd [#allocation4], %s747
      %s750 = sshll.u32 [#allocation10], 4
      %s751 = int_to_ptr.vmem [resolvable:$true] %s750
      %753 = dma.vmem_to_hbm [thread:$0]  %s751, 64, %s7, [#allocation4]
    $region49: #{tpu_custom_call.1} parent=1 // pred_fallthru
      _
    // Predicated region
    $region50: #{tpu_custom_call.1} parent=1 // pred_check
      _
    $region51: #{tpu_custom_call.1} parent=1 // pred_check_branch
      %755 = sbr.rel (0) target = $region53
    $region52: #{tpu_custom_call.1} parent=1 // pred_region
      %756 = dma.done [#allocation4], 64
    $region53: #{tpu_custom_call.1} parent=1 // pred_fallthru
      _
    %757 = vsyncpa [#allocation3], 1
    %758 = vsyncpa [#allocation6], 1
    %759 = vsyncpa [#allocation9], 1
    %760 = vsyncpa [#allocation4], 1

</llo_original>
